<compile_context>
chip_gen: v6e
topology: v6e:2x2x1
jax: 0.10.0
libtpu: 0.0.40
codegen_flags: <defaults>
</compile_context>

<pallas_src>
import math

import jax
import jax.numpy as jnp
import numpy as np
from jax.experimental import pallas as pl
from jax.experimental.pallas import tpu as pltpu


def _tree_attn_kernel(enc_ref, hproj_ref, mask_ref, we_ref, ws_ref, out_ref):
    S, Bt, I = enc_ref.shape
    Hout = we_ref.shape[1]

    enc = enc_ref[...]                                   # (S, Bt, I), model dtype

    # Encoder projection: fold S*Bt into the MXU M dimension (one wide push).
    # When Bt is a multiple of 8 (or Bt == B) this reshape is a layout no-op.
    e_proj = jnp.dot(enc.reshape(S * Bt, I), we_ref[...],
                     preferred_element_type=jnp.float32)
    e_proj = e_proj.reshape(S, Bt, Hout)                 # f32

    # Hidden projection + attn bias precomputed in the wrapper: (Bt, Hout).
    feat = jnp.tanh(e_proj + hproj_ref[...][None, :, :])  # EUP tanh, (S, Bt, Hout)

    # score Linear (out_features = 1): VPU multiply + lane reduce.
    # (score bias dropped: softmax is invariant to a per-row constant shift.)
    energies_sb = jnp.sum(feat * ws_ref[...], axis=-1)    # (S, Bt)

    # (S, Bt) -> (Bt, S) on the XLU; softmax runs along the lane axis (S).
    energies = energies_sb.T                              # (Bt, S) f32

    # masked_fill_(seq_mask, -1e12)
    energies = jnp.where(mask_ref[...] != 0.0, jnp.float32(-1e12), energies)

    # Numerically stable softmax over S; reciprocal on the EUP slot.
    m = jnp.max(energies, axis=-1, keepdims=True)
    p = jnp.exp(energies - m)
    denom = jnp.sum(p, axis=-1, keepdims=True)
    out_ref[...] = (p * pl.reciprocal(denom, approx=True)).astype(out_ref.dtype)


def _tpu_env():
    """(vmem_capacity_bytes, tensorcores_per_chip) with safe fallbacks."""
    vmem = 128 * 1024 * 1024
    cores = 1
    try:
        info = pltpu.get_tpu_info()
        vmem = int(getattr(info, "vmem_capacity_bytes", vmem))
        cores = int(getattr(info, "num_cores", cores) or cores)
    except Exception:
        pass
    try:
        cores = max(cores, int(getattr(jax.devices()[0], "num_cores", 1) or 1))
    except Exception:
        pass
    return vmem, cores


def _pick_bt(B, S, I, Hout, enc_bytes, vmem_budget, num_cores):
    """Largest valid batch tile that fits the per-step VMEM budget.

    Valid Bt: divisors of B that are multiples of 8 (sublane-dense tiles,
    layout-no-op reshape) plus Bt == B.  On >=2-TC chips (v7x) prefer a grid
    whose length is a multiple of the core count so the "parallel" axis splits
    evenly; on single-TC chips just take the biggest that fits.
    """
    valid = sorted({d for d in range(8, B + 1, 8) if B % d == 0} | {B},
                   reverse=True)

    def step_bytes(bt):
        f32 = 4
        enc_tile = 2 * S * bt * I * enc_bytes          # double-buffered input
        weights = 2 * I * Hout * enc_bytes             # We (still 2 buffers)
        hproj = 2 * bt * Hout * f32
        mask = 2 * bt * S * f32
        outt = 2 * bt * S * f32
        interm = 3 * S * bt * Hout * f32               # e_proj / feat headroom
        return enc_tile + weights + hproj + mask + outt + interm

    fits = [bt for bt in valid if step_bytes(bt) <= vmem_budget]
    if not fits:
        fits = [min(valid)]
    if num_cores >= 2:
        even = [bt for bt in fits if (B // bt) % num_cores == 0]
        if even:
            return max(even)
    return max(fits)


def tree_attn_forward(hidden, encoder_outputs,
                      W_attn, b_attn, w_score, b_score, seq_mask=None):
    """hidden: (1, B, H); encoder_outputs: (S, B, I); seq_mask: (B, S) or None.

    Returns attention weights of shape (B, 1, S), matching TreeAttn.forward.
    """
    S, B, I = encoder_outputs.shape
    H = hidden.shape[-1]
    Hout = W_attn.shape[0]
    assert W_attn.shape == (Hout, H + I)

    cdtype = encoder_outputs.dtype          # model dtype for the MXU operands

    # Split the concat-projection: attn(cat(h, e)) = h @ Wh^T + e @ We^T + b.
    # The hidden half (M = B rows only) + bias is hoisted to one XLA matmul.
    h_pb = (hidden.reshape(B, H).astype(jnp.float32)
            @ W_attn[:, :H].astype(jnp.float32).T
            + b_attn.astype(jnp.float32).reshape(1, Hout))          # (B, Hout) f32
    we_t = W_attn[:, H:].T.astype(cdtype)                           # (I, Hout)
    ws = w_score.reshape(1, Hout).astype(jnp.float32)               # (1, Hout)

    if seq_mask is None:
        mask = jnp.zeros((B, S), jnp.float32)
    else:
        mask = seq_mask.reshape(B, S).astype(jnp.float32)

    # --- VMEM-budget-driven batch tiling (generation aware: 64 MiB on v7x) ---
    vmem_cap, num_cores = _tpu_env()
    vmem_limit = int(vmem_cap * 0.7)
    enc_bytes = jnp.dtype(cdtype).itemsize
    Bt = _pick_bt(B, S, I, Hout, enc_bytes, int(vmem_limit * 0.85), num_cores)
    grid = (B // Bt,)

    in_specs = [
        pl.BlockSpec((S, Bt, I), lambda b: (0, b, 0)),   # encoder outputs (orig layout)
        pl.BlockSpec((Bt, Hout), lambda b: (b, 0)),      # hidden projection + bias
        pl.BlockSpec((Bt, S), lambda b: (b, 0)),         # seq mask
        pl.BlockSpec((I, Hout), lambda b: (0, 0)),       # We (encoder half of attn)
        pl.BlockSpec((1, Hout), lambda b: (0, 0)),       # score weight
    ]

    out = pl.pallas_call(
        _tree_attn_kernel,
        out_shape=jax.ShapeDtypeStruct((B, S), jnp.float32),
        grid_spec=pltpu.PrefetchScalarGridSpec(
            num_scalar_prefetch=0,
            grid=grid,
            in_specs=in_specs,
            out_specs=pl.BlockSpec((Bt, S), lambda b: (b, 0)),
        ),
        compiler_params=pltpu.CompilerParams(
            dimension_semantics=("parallel",),
            vmem_limit_bytes=vmem_limit),
    )(encoder_outputs, h_pb, mask, we_t, ws)

    return out.reshape(B, 1, S)             # metadata-only reshape


def reference_forward(hidden, encoder_outputs,
                      W_attn, b_attn, w_score, b_score, seq_mask=None):
    """Pure-JAX mirror of TreeAttn.forward (PyTorch semantics)."""
    S, B, I = encoder_outputs.shape
    H = hidden.shape[-1]
    hid_rep = jnp.broadcast_to(hidden, (S, B, H))
    energy_in = jnp.concatenate([hid_rep, encoder_outputs], axis=2).reshape(-1, H + I)
    feat = jnp.tanh(energy_in @ W_attn.T + b_attn)
    e = (feat @ w_score.T + b_score)[:, 0]
    e = e.reshape(S, B).T                      # (B, S)
    if seq_mask is not None:
        e = jnp.where(seq_mask.astype(bool), -1e12, e)
    return jax.nn.softmax(e, axis=1)[:, None, :]


if __name__ == "__main__":
    S, B = 8, 2                     # max_len, batch
    input_size, hidden_size = 32, 32

    key = jax.random.PRNGKey(0)
    k1, k2, k3, k4, k5, k6 = jax.random.split(key, 6)

    hidden = jax.random.normal(k1, (1, B, hidden_size), jnp.float32)
    encoder_outputs = jax.random.normal(k2, (S, B, input_size), jnp.float32)
    lengths = jnp.array([S, 5])
    seq_mask = (jnp.arange(S)[None, :] >= lengths[:, None]).astype(jnp.float32)  # (B, S)

    # PyTorch nn.Linear default init: U(-1/sqrt(fan_in), 1/sqrt(fan_in)).
    s1 = 1.0 / math.sqrt(hidden_size + input_size)
    s2 = 1.0 / math.sqrt(hidden_size)
    W_attn = jax.random.uniform(k3, (hidden_size, hidden_size + input_size),
                                jnp.float32, -s1, s1)
    b_attn = jax.random.uniform(k4, (hidden_size,), jnp.float32, -s1, s1)
    w_score = jax.random.uniform(k5, (1, hidden_size), jnp.float32, -s2, s2)
    b_score = jax.random.uniform(k6, (1,), jnp.float32, -s2, s2)

    out = tree_attn_forward(hidden, encoder_outputs,
                            W_attn, b_attn, w_score, b_score, seq_mask)
    out = jax.block_until_ready(out)

    ref = reference_forward(hidden, encoder_outputs,
                            W_attn, b_attn, w_score, b_score, seq_mask)
    np.testing.assert_allclose(np.asarray(out), np.asarray(ref),
                               rtol=1e-3, atol=1e-4)
    assert out.shape == (B, 1, S)

    print("KERNEL_OK")
</pallas_src>

<mosaic_0001>
module attributes {stable_mosaic.version = 11 : i64} {
  func.func @_tree_attn_kernel(%arg0: i32, %arg1: memref<8x2x32xf32, #tpu.memory_space<vmem>>, %arg2: memref<2x32xf32, #tpu.memory_space<vmem>>, %arg3: memref<2x8xf32, #tpu.memory_space<vmem>>, %arg4: memref<32x32xf32, #tpu.memory_space<vmem>>, %arg5: memref<1x32xf32, #tpu.memory_space<vmem>>, %arg6: memref<2x8xf32, #tpu.memory_space<vmem>>) attributes {dimension_semantics = [#tpu.dimension_semantics<parallel>], iteration_bounds = array<i64: 1>, scalar_prefetch = 0 : i64, scratch_operands = 0 : i64, tpu.core_type = #tpu.core_type<tc>, window_params = [{transform_indices = @transform_0, window_bounds = array<i64: 8, 2, 32>}, {transform_indices = @transform_1, window_bounds = array<i64: 2, 32>}, {transform_indices = @transform_2, window_bounds = array<i64: 2, 8>}, {pipeline_mode = #tpu.pipeline_mode<synchronous>, transform_indices = @transform_3, window_bounds = array<i64: 32, 32>}, {pipeline_mode = #tpu.pipeline_mode<synchronous>, transform_indices = @transform_4, window_bounds = array<i64: 1, 32>}, {transform_indices = @transform_5, window_bounds = array<i64: 2, 8>}]} {
    %c0 = arith.constant 0 : index
    %c0_0 = arith.constant 0 : index
    %c0_1 = arith.constant 0 : index
    %0 = vector.load %arg1[%c0, %c0_0, %c0_1] : memref<8x2x32xf32, #tpu.memory_space<vmem>>, vector<8x2x32xf32>
    %1 = vector.shape_cast %0 : vector<8x2x32xf32> to vector<16x32xf32>
    %c0_2 = arith.constant 0 : index
    %c0_3 = arith.constant 0 : index
    %2 = vector.load %arg4[%c0_2, %c0_3] : memref<32x32xf32, #tpu.memory_space<vmem>>, vector<32x32xf32>
    %cst = arith.constant dense<0.000000e+00> : vector<16x32xf32>
    %3 = tpu.matmul %1, %2, %cst {dimension_numbers = #tpu.dot_dimension_numbers<[1], [0], [0], [1], [0, 0, 1, 1], [], []>} : vector<16x32xf32>, vector<32x32xf32>, vector<16x32xf32> -> vector<16x32xf32>
    %4 = vector.shape_cast %3 : vector<16x32xf32> to vector<8x2x32xf32>
    %c0_4 = arith.constant 0 : index
    %c0_5 = arith.constant 0 : index
    %5 = vector.load %arg2[%c0_4, %c0_5] : memref<2x32xf32, #tpu.memory_space<vmem>>, vector<2x32xf32>
    %6 = vector.shape_cast %5 : vector<2x32xf32> to vector<1x2x32xf32>
    %7 = vector.broadcast %6 : vector<1x2x32xf32> to vector<8x2x32xf32>
    %8 = arith.addf %4, %7 : vector<8x2x32xf32>
    %9 = math.tanh %8 : vector<8x2x32xf32>
    %c0_6 = arith.constant 0 : index
    %c0_7 = arith.constant 0 : index
    %10 = vector.load %arg5[%c0_6, %c0_7] : memref<1x32xf32, #tpu.memory_space<vmem>>, vector<1x32xf32>
    %11 = vector.shape_cast %10 : vector<1x32xf32> to vector<1x1x32xf32>
    %12 = vector.broadcast %11 : vector<1x1x32xf32> to vector<8x2x32xf32>
    %13 = arith.mulf %9, %12 : vector<8x2x32xf32>
    %cst_8 = arith.constant dense<0.000000e+00> : vector<8x2xf32>
    %14 = vector.multi_reduction <add>, %13, %cst_8 [2] : vector<8x2x32xf32> to vector<8x2xf32>
    %15 = tpu.transpose %14, [1, 0] : vector<8x2xf32> -> vector<2x8xf32>
    %c0_9 = arith.constant 0 : index
    %c0_10 = arith.constant 0 : index
    %16 = vector.load %arg3[%c0_9, %c0_10] : memref<2x8xf32, #tpu.memory_space<vmem>>, vector<2x8xf32>
    %cst_11 = arith.constant 0.000000e+00 : f32
    %17 = vector.broadcast %cst_11 : f32 to vector<2x8xf32>
    %18 = arith.cmpf one, %16, %17 : vector<2x8xf32>
    %cst_12 = arith.constant -9.99999995E+11 : f32
    %19 = vector.broadcast %cst_12 : f32 to vector<2x8xf32>
    %20 = arith.select %18, %19, %15 : vector<2x8xi1>, vector<2x8xf32>
    %cst_13 = arith.constant dense<0xFF800000> : vector<2xf32>
    %21 = vector.multi_reduction <maximumf>, %20, %cst_13 [1] : vector<2x8xf32> to vector<2xf32>
    %22 = vector.shape_cast %21 : vector<2xf32> to vector<2x1xf32>
    %23 = vector.broadcast %22 : vector<2x1xf32> to vector<2x8xf32>
    %24 = arith.subf %20, %23 : vector<2x8xf32>
    %25 = math.exp %24 : vector<2x8xf32>
    %cst_14 = arith.constant dense<0.000000e+00> : vector<2xf32>
    %26 = vector.multi_reduction <add>, %25, %cst_14 [1] : vector<2x8xf32> to vector<2xf32>
    %27 = vector.shape_cast %26 : vector<2xf32> to vector<2x1xf32>
    %28 = tpu.reciprocal %27 {approx = true} : vector<2x1xf32> -> vector<2x1xf32>
    %29 = vector.broadcast %28 : vector<2x1xf32> to vector<2x8xf32>
    %30 = arith.mulf %25, %29 : vector<2x8xf32>
    %c0_15 = arith.constant 0 : index
    %c0_16 = arith.constant 0 : index
    %31 = vector.load %arg6[%c0_15, %c0_16] : memref<2x8xf32, #tpu.memory_space<vmem>>, vector<2x8xf32>
    tpu.vector_store %arg6[%c0_15, %c0_16], %30 {strides = array<i32>} : memref<2x8xf32, #tpu.memory_space<vmem>>, vector<2x8xf32>,
    return
  }
  func.func @transform_0(%arg0: i32) -> (i32, i32, i32) {
    %c0_i32 = arith.constant 0 : i32
    %c0_i32_0 = arith.constant 0 : i32
    %c0_i32_1 = arith.constant 0 : i32
    return %c0_i32, %arg0, %c0_i32_0 : i32, i32, i32
  }
  func.func @transform_1(%arg0: i32) -> (i32, i32) {
    %c0_i32 = arith.constant 0 : i32
    %c0_i32_0 = arith.constant 0 : i32
    return %arg0, %c0_i32 : i32, i32
  }
  func.func @transform_2(%arg0: i32) -> (i32, i32) {
    %c0_i32 = arith.constant 0 : i32
    %c0_i32_0 = arith.constant 0 : i32
    return %arg0, %c0_i32 : i32, i32
  }
  func.func @transform_3(%arg0: i32) -> (i32, i32) {
    %c0_i32 = arith.constant 0 : i32
    %c0_i32_0 = arith.constant 0 : i32
    %c0_i32_1 = arith.constant 0 : i32
    return %c0_i32, %c0_i32_0 : i32, i32
  }
  func.func @transform_4(%arg0: i32) -> (i32, i32) {
    %c0_i32 = arith.constant 0 : i32
    %c0_i32_0 = arith.constant 0 : i32
    %c0_i32_1 = arith.constant 0 : i32
    return %c0_i32, %c0_i32_0 : i32, i32
  }
  func.func @transform_5(%arg0: i32) -> (i32, i32) {
    %c0_i32 = arith.constant 0 : i32
    %c0_i32_0 = arith.constant 0 : i32
    return %arg0, %c0_i32 : i32, i32
  }
}

</mosaic_0001>

<llo_original>
// kernel: tpu_custom_call.1
$region0: #{tpu_custom_call.1}
  #allocation0 [shape = 'u32[]', space=smem, size = 0x4, offset = 0x4, fixed_abs, tag = 'smem constant byte address 0x4 - core index']
  #allocation1 [shape = 'u32[144,128]{1,0:T(1,128)}', space=vmem, size = 0x12000, scoped, tag = 'internal scratch']
  %s0 = inlined_call_operand.hbm [shape: f32[8,2,32], index: 0, kind: input, shape index: {}]
  %s1 = inlined_call_operand.hbm [shape: f32[2,32], index: 1, kind: input, shape index: {}]
  %s2 = inlined_call_operand.vmem [shape: f32[2,8], index: 2, kind: input, shape index: {}]
  %s3 = inlined_call_operand.hbm [shape: f32[32,32], index: 3, kind: input, shape index: {}]
  %s4 = inlined_call_operand.vmem [shape: f32[1,32], index: 4, kind: input, shape index: {}]
  %s5 = inlined_call_operand.hbm [shape: f32[2,8], index: 5, kind: output, shape index: {}]
  %s6 = sld [smem:[#allocation0]]
  $region42: #{tpu_custom_call.1} parent=0
    _
  %s8 = ssub.s32 1, %s6
  %s9 = scalar_select 0, %s8, %s6
  $region1: #{tpu_custom_call.1} parent=0
    #allocation2 [shape = 'u8[8192]{0}', space=vmem, size = 0x2000, scoped, tag = 'input window, operand 0, single buffered']
    #allocation3 [shape = 's32[1]{0}', space=sflag, size = 0x4, scoped, tag = 'scoped memory for tpu_custom_call.1']
    #allocation4 [shape = 's32[1]{0}', space=sflag, size = 0x4, scoped, tag = 'scoped memory for tpu_custom_call.1']
    #allocation5 [shape = 'u8[1024]{0}', space=vmem, size = 0x400, scoped, tag = 'input window, operand 1, single buffered']
    #allocation6 [shape = 's32[1]{0}', space=sflag, size = 0x4, scoped, tag = 'scoped memory for tpu_custom_call.1']
    #allocation7 [shape = 'u8[16384]{0}', space=vmem, size = 0x4000, scoped, tag = 'input window, operand 3, single buffered']
    #allocation8 [shape = 'u8[1024]{0}', space=vmem, size = 0x400, scoped, tag = 'output window, operand 0, single buffered']
    %10 = vsyncpa [#allocation3], 0
    %11 = vsyncpa [#allocation6], 0
    %12 = vsyncpa [#allocation4], 0
    // Predicated region
    $region2: #{tpu_custom_call.1} parent=1 // pred_check
      _
    $region3: #{tpu_custom_call.1} parent=1 // pred_check_branch
      %14 = sbr.rel (0) target = $region5
    $region4: #{tpu_custom_call.1} parent=1 // pred_region
      %s16 = ssub.s32 256, 256
      %17 = vsyncadd [#allocation3], %s16
      %s18 = sshll.u32 [#allocation2], 4
      %s19 = int_to_ptr.vmem [resolvable:$true] %s18
      %24 = dma.hbm_to_vmem [thread:$0]  %s0, 256, %s19, [#allocation3], 32, 32, 2
    $region5: #{tpu_custom_call.1} parent=1 // pred_fallthru
      _
    // Predicated region
    $region6: #{tpu_custom_call.1} parent=1 // pred_check
      _
    $region7: #{tpu_custom_call.1} parent=1 // pred_check_branch
      %26 = sbr.rel (0) target = $region9
    $region8: #{tpu_custom_call.1} parent=1 // pred_region
      %s28 = ssub.s32 32, 32
      %29 = vsyncadd [#allocation6], %s28
      %s31 = sshll.u32 [#allocation5], 4
      %s32 = int_to_ptr.vmem [resolvable:$true] %s31
      %34 = dma.hbm_to_vmem [thread:$0]  %s1, 32, %s32, [#allocation6]
    $region9: #{tpu_custom_call.1} parent=1 // pred_fallthru
      _
    // Predicated region
    $region10: #{tpu_custom_call.1} parent=1 // pred_check
      _
    $region11: #{tpu_custom_call.1} parent=1 // pred_check_branch
      %36 = sbr.rel (0) target = $region13
    $region12: #{tpu_custom_call.1} parent=1 // pred_region
      _
    $region13: #{tpu_custom_call.1} parent=1 // pred_fallthru
      _
    // Predicated region
    $region14: #{tpu_custom_call.1} parent=1 // pred_check
      _
    $region15: #{tpu_custom_call.1} parent=1 // pred_check_branch
      %38 = sbr.rel (0) target = $region17
    $region16: #{tpu_custom_call.1} parent=1 // pred_region
      %s40 = ssub.s32 512, 512
      %41 = vsyncadd [#allocation6], %s40
      %s42 = sshll.u32 [#allocation7], 4
      %s43 = int_to_ptr.vmem [resolvable:$true] %s42
      %48 = dma.hbm_to_vmem [thread:$0]  %s3, 512, %s43, [#allocation6], 128, 128, 8
    $region17: #{tpu_custom_call.1} parent=1 // pred_fallthru
      _
    // Predicated region
    $region18: #{tpu_custom_call.1} parent=1 // pred_check
      _
    $region19: #{tpu_custom_call.1} parent=1 // pred_check_branch
      %50 = sbr.rel (0) target = $region21
    $region20: #{tpu_custom_call.1} parent=1 // pred_region
      _
    $region21: #{tpu_custom_call.1} parent=1 // pred_fallthru
      _
    // Predicated region
    $region22: #{tpu_custom_call.1} parent=1 // pred_check
      _
    $region23: #{tpu_custom_call.1} parent=1 // pred_check_branch
      %52 = sbr.rel (0) target = $region25
    $region24: #{tpu_custom_call.1} parent=1 // pred_region
      %53 = dma.done [#allocation3], 256
    $region25: #{tpu_custom_call.1} parent=1 // pred_fallthru
      _
    // Predicated region
    $region26: #{tpu_custom_call.1} parent=1 // pred_check
      _
    $region27: #{tpu_custom_call.1} parent=1 // pred_check_branch
      %55 = sbr.rel (0) target = $region29
    $region28: #{tpu_custom_call.1} parent=1 // pred_region
      %56 = dma.done [#allocation6], 32
    $region29: #{tpu_custom_call.1} parent=1 // pred_fallthru
      _
    // Predicated region
    $region30: #{tpu_custom_call.1} parent=1 // pred_check
      _
    $region31: #{tpu_custom_call.1} parent=1 // pred_check_branch
      %58 = sbr.rel (0) target = $region33
    $region32: #{tpu_custom_call.1} parent=1 // pred_region
      %59 = dma.done [#allocation6], 512
    $region33: #{tpu_custom_call.1} parent=1 // pred_fallthru
      _
    %v60 = vld [vmem:[#allocation2] sm:$0x3]
    %v61 = vld [vmem:[#allocation2 + $0x2] sm:$0x3]
    %v62 = vld [vmem:[#allocation2 + $0x4] sm:$0x3]
    %v63 = vld [vmem:[#allocation2 + $0x6] sm:$0x3]
    %v64 = vld [vmem:[#allocation2 + $0x8] sm:$0x3]
    %v65 = vld [vmem:[#allocation2 + $0xa] sm:$0x3]
    %v66 = vld [vmem:[#allocation2 + $0xc] sm:$0x3]
    %v67 = vld [vmem:[#allocation2 + $0xe] sm:$0x3]
    %v68 = vld [vmem:[#allocation7] sm:$0xff]
    %v69 = vld [vmem:[#allocation7 + $0x8] sm:$0xff]
    %v70 = vld [vmem:[#allocation7 + $0x10] sm:$0xff]
    %v71 = vld [vmem:[#allocation7 + $0x18] sm:$0xff]
    %v80 = vcombine.low %v60, %v61
    %v81 = vcombine.low %v62, %v63
    %v83 = vunpack.c.l.s4 1983009808
    %v84 = vunpack.c.0.s8 %v83
    %v85 = vlaneseq
    %v86 = vshrl.u32 %v85, 7
    %v87 = vsub.s32 %v84, %v86
    %v88 = vrot.slane %v80, %v87
    %v90 = vunpack.c.l.s4 1983009808
    %v91 = vunpack.c.0.s8 %v90
    %v92 = vlaneseq
    %v93 = vshrl.u32 %v92, 7
    %v94 = vsub.s32 %v91, %v93
    %v95 = vrot.slane %v81, %v94
    %v96 = vcombine.low %v88, %v95
    %v97 = vcombine.low %v64, %v65
    %v98 = vcombine.low %v66, %v67
    %v100 = vunpack.c.l.s4 1983009808
    %v101 = vunpack.c.0.s8 %v100
    %v102 = vlaneseq
    %v103 = vshrl.u32 %v102, 7
    %v104 = vsub.s32 %v101, %v103
    %v105 = vrot.slane %v97, %v104
    %v107 = vunpack.c.l.s4 1983009808
    %v108 = vunpack.c.0.s8 %v107
    %v109 = vlaneseq
    %v110 = vshrl.u32 %v109, 7
    %v111 = vsub.s32 %v108, %v110
    %v112 = vrot.slane %v98, %v111
    %v113 = vcombine.low %v105, %v112
    %vm114 = vcmask 261120
    %v115 = vsel %vm114, %v96, 0
    %v117 = vsel %vm114, %v113, 0
    %119 = vmatprep.subr.mxu0 0.0
    %120 = vmatpush1.msra.mxu0 0.0
    %121 = vmatprep.subr.mxu0 0.0
    %122 = vmatpush1.msra.mxu0 0.0
    %123 = vmatprep.subr.mxu0 0.0
    %124 = vmatpush1.msra.mxu0 0.0
    %125 = vmatprep.subr.mxu0 0.0
    %126 = vmatpush1.msra.mxu0 0.0
    %127 = vmatprep.subr.mxu0 0.0
    %128 = vmatpush1.msra.mxu0 0.0
    %129 = vmatprep.subr.mxu0 0.0
    %130 = vmatpush1.msra.mxu0 0.0
    %131 = vmatprep.subr.mxu0 0.0
    %132 = vmatpush1.msra.mxu0 0.0
    %133 = vmatprep.subr.mxu0 0.0
    %134 = vmatpush1.msra.mxu0 0.0
    %135 = vmatprep.subr.mxu0 0.0
    %136 = vmatpush1.msra.mxu0 0.0
    %137 = vmatprep.subr.mxu0 0.0
    %138 = vmatpush1.msra.mxu0 0.0
    %139 = vmatprep.subr.mxu0 0.0
    %140 = vmatpush1.msra.mxu0 0.0
    %141 = vmatprep.subr.mxu0 0.0
    %142 = vmatpush1.msra.mxu0 0.0
    %143 = vmatprep.subr.mxu0 0.0
    %144 = vmatpush1.msra.mxu0 %v71
    %145 = vmatprep.subr.mxu0 0.0
    %146 = vmatpush1.msra.mxu0 %v70
    %147 = vmatprep.subr.mxu0 0.0
    %148 = vmatpush1.msra.mxu0 %v69
    %149 = vmatprep.subr.mxu0 0.0
    %150 = vmatpush1.msra.mxu0 %v68
    %151 = vmatprep.subr.mxu0 0.0
    %152 = vmatpush2.msra.mxu0 0.0
    %153 = vmatprep.subr.mxu0 0.0
    %154 = vmatpush2.msra.mxu0 0.0
    %155 = vmatprep.subr.mxu0 0.0
    %156 = vmatpush2.msra.mxu0 0.0
    %157 = vmatprep.subr.mxu0 0.0
    %158 = vmatpush2.msra.mxu0 0.0
    %159 = vmatprep.subr.mxu0 0.0
    %160 = vmatpush2.msra.mxu0 0.0
    %161 = vmatprep.subr.mxu0 0.0
    %162 = vmatpush2.msra.mxu0 0.0
    %163 = vmatprep.subr.mxu0 0.0
    %164 = vmatpush2.msra.mxu0 0.0
    %165 = vmatprep.subr.mxu0 0.0
    %166 = vmatpush2.msra.mxu0 0.0
    %167 = vmatprep.subr.mxu0 0.0
    %168 = vmatpush2.msra.mxu0 0.0
    %169 = vmatprep.subr.mxu0 0.0
    %170 = vmatpush2.msra.mxu0 0.0
    %171 = vmatprep.subr.mxu0 0.0
    %172 = vmatpush2.msra.mxu0 0.0
    %173 = vmatprep.subr.mxu0 0.0
    %174 = vmatpush2.msra.mxu0 0.0
    %175 = vmatprep.subr.mxu0 0.0
    %176 = vmatpush2.msra.mxu0 0.0
    %177 = vmatprep.subr.mxu0 0.0
    %178 = vmatpush2.msra.mxu0 0.0
    %179 = vmatprep.subr.mxu0 0.0
    %180 = vmatpush2.msra.mxu0 0.0
    %181 = vmatprep.subr.mxu0 0.0
    %182 = vmatpush2.msra.mxu0 0.0
    %183 = vmatprep.mubr.f32.mxu0 0.0
    %184 = vmatmul.mubr.f32.gmra.mxu0 %v115
    %v185 = vpop.f32.mrf.mxu0
    %v186 = vadd.f32 0.0, %v185
    %v187 = vpop.f32.mrf.mxu0
    %188 = vmatprep.mubr.f32.mxu0 0.0
    %189 = vmatmul.mubr.f32.gmra.mxu0 %v117
    %v190 = vpop.f32.mrf.mxu0
    %v191 = vadd.f32 0.0, %v190
    %v192 = vpop.f32.mrf.mxu0
    %193 = vdwg.mxu0
    %v196 = vcombine.high %v186, %v186
    %v198 = vunpack.c.l.s4 1983009808
    %v199 = vunpack.c.0.s8 %v198
    %v200 = vlaneseq
    %v201 = vshrl.u32 %v200, 7
    %v202 = vsub.s32 %v199, %v201
    %v203 = vrot.slane %v186, %v202
    %v205 = vunpack.c.l.s4 1983009808
    %v206 = vunpack.c.0.s8 %v205
    %v207 = vlaneseq
    %v208 = vshrl.u32 %v207, 7
    %v209 = vsub.s32 %v206, %v208
    %v210 = vrot.slane %v196, %v209
    %v211 = vcombine.high %v203, %v203
    %v212 = vcombine.high %v210, %v210
    %v213 = vcombine.high %v191, %v191
    %v215 = vunpack.c.l.s4 1983009808
    %v216 = vunpack.c.0.s8 %v215
    %v217 = vlaneseq
    %v218 = vshrl.u32 %v217, 7
    %v219 = vsub.s32 %v216, %v218
    %v220 = vrot.slane %v191, %v219
    %v222 = vunpack.c.l.s4 1983009808
    %v223 = vunpack.c.0.s8 %v222
    %v224 = vlaneseq
    %v225 = vshrl.u32 %v224, 7
    %v226 = vsub.s32 %v223, %v225
    %v227 = vrot.slane %v213, %v226
    %v228 = vcombine.high %v220, %v220
    %v229 = vcombine.high %v227, %v227
    %v238 = vld [vmem:[#allocation5] sm:$0x3]
    %v239 = vadd.f32 %v203, %v238
    %v240 = vadd.f32 %v211, %v238
    %v241 = vadd.f32 %v210, %v238
    %v242 = vadd.f32 %v212, %v238
    %v243 = vadd.f32 %v220, %v238
    %v244 = vadd.f32 %v228, %v238
    %v245 = vadd.f32 %v227, %v238
    %v246 = vadd.f32 %v229, %v238
    %v247 = vtanh.pop %v239
    %v248 = vtanh.pop %v240
    %v249 = vtanh.pop %v241
    %v250 = vtanh.pop %v242
    %v251 = vtanh.pop %v243
    %v252 = vtanh.pop %v244
    %v253 = vtanh.pop %v245
    %v254 = vtanh.pop %v246
    %v255 = vld [vmem:[%s4] sm:$0x1]
    %v257 = vlaneseq
    %v258 = vshrl.u32 %v257, 7
    %v259 = vsub.s32 0, %v258
    %v260 = vrot.slane %v255, %v259
    %v262 = vmul.f32 %v247, %v260
    %v263 = vmul.f32 %v248, %v260
    %v264 = vmul.f32 %v249, %v260
    %v265 = vmul.f32 %v250, %v260
    %v266 = vmul.f32 %v251, %v260
    %v267 = vmul.f32 %v252, %v260
    %v268 = vmul.f32 %v253, %v260
    %v269 = vmul.f32 %v254, %v260
    %vm270 = vcmask 254976
    %v271 = vsel %vm270, %v262, 0.0
    %272 = vadd.xlane.f32.xlu0 %v271
    %v273 = vpop.xlane.xlu0 %272
    %v274 = vsel %vm270, %v263, 0.0
    %275 = vadd.xlane.f32.xlu0 %v274
    %v276 = vpop.xlane.xlu0 %275
    %v277 = vsel %vm270, %v264, 0.0
    %278 = vadd.xlane.f32.xlu0 %v277
    %v279 = vpop.xlane.xlu0 %278
    %v280 = vsel %vm270, %v265, 0.0
    %281 = vadd.xlane.f32.xlu0 %v280
    %v282 = vpop.xlane.xlu0 %281
    %v283 = vsel %vm270, %v266, 0.0
    %284 = vadd.xlane.f32.xlu0 %v283
    %v285 = vpop.xlane.xlu0 %284
    %v286 = vsel %vm270, %v267, 0.0
    %287 = vadd.xlane.f32.xlu0 %v286
    %v288 = vpop.xlane.xlu0 %287
    %v289 = vsel %vm270, %v268, 0.0
    %290 = vadd.xlane.f32.xlu0 %v289
    %v291 = vpop.xlane.xlu0 %290
    %v292 = vsel %vm270, %v269, 0.0
    %293 = vadd.xlane.f32.xlu0 %v292
    %v294 = vpop.xlane.xlu0 %293
    %v303 = vlaneseq
    %v304 = vand.u32 %v303, 127
    %v305 = vlaneseq
    %v306 = vshrl.u32 %v305, 7
    %v307 = vsub.s32 %v304, %v306
    %v308 = vrot.slane %v273, %v307
    %v309 = vlaneseq
    %v310 = vshrl.u32 %v309, 7
    %v311 = vsub.s32 %v304, %v310
    %v312 = vrot.slane %v276, %v311
    %v313 = vlaneseq
    %v314 = vshrl.u32 %v313, 7
    %v315 = vsub.s32 %v304, %v314
    %v316 = vrot.slane %v279, %v315
    %v317 = vlaneseq
    %v318 = vshrl.u32 %v317, 7
    %v319 = vsub.s32 %v304, %v318
    %v320 = vrot.slane %v282, %v319
    %v321 = vlaneseq
    %v322 = vshrl.u32 %v321, 7
    %v323 = vsub.s32 %v304, %v322
    %v324 = vrot.slane %v285, %v323
    %v325 = vlaneseq
    %v326 = vshrl.u32 %v325, 7
    %v327 = vsub.s32 %v304, %v326
    %v328 = vrot.slane %v288, %v327
    %v329 = vlaneseq
    %v330 = vshrl.u32 %v329, 7
    %v331 = vsub.s32 %v304, %v330
    %v332 = vrot.slane %v291, %v331
    %v333 = vlaneseq
    %v334 = vshrl.u32 %v333, 7
    %v335 = vsub.s32 %v304, %v334
    %v336 = vrot.slane %v294, %v335
    %vm337 = vcmask 1041409
    %v338 = vsel %vm337, %v312, %v308
    %vm339 = vcmask 1042434
    %v340 = vsel %vm339, %v316, %v338
    %vm341 = vcmask 1043459
    %v342 = vsel %vm341, %v320, %v340
    %vm343 = vcmask 1044484
    %v344 = vsel %vm343, %v324, %v342
    %vm345 = vcmask 1045509
    %v346 = vsel %vm345, %v328, %v344
    %vm347 = vcmask 1046534
    %v348 = vsel %vm347, %v332, %v346
    %vm349 = vcmask 1047559
    %v350 = vsel %vm349, %v336, %v348
    %352 = vxpose.xlu0.b32.start [1/16] %v350, 128
    %353 = vxpose.xlu0.b32.cont [2/16] 0.0, 128
    %354 = vxpose.xlu0.b32.cont [3/16] 0.0, 128
    %355 = vxpose.xlu0.b32.cont [4/16] 0.0, 128
    %356 = vxpose.xlu0.b32.cont [5/16] 0.0, 128
    %357 = vxpose.xlu0.b32.cont [6/16] 0.0, 128
    %358 = vxpose.xlu0.b32.cont [7/16] 0.0, 128
    %359 = vxpose.xlu0.b32.cont [8/16] 0.0, 128
    %360 = vxpose.xlu0.b32.cont [9/16] 0.0, 128
    %361 = vxpose.xlu0.b32.cont [10/16] 0.0, 128
    %362 = vxpose.xlu0.b32.cont [11/16] 0.0, 128
    %363 = vxpose.xlu0.b32.cont [12/16] 0.0, 128
    %364 = vxpose.xlu0.b32.cont [13/16] 0.0, 128
    %365 = vxpose.xlu0.b32.cont [14/16] 0.0, 128
    %366 = vxpose.xlu0.b32.cont [15/16] 0.0, 128
    %367 = vxpose.xlu0.b32.end [16/16] 0.0, 128
    %v368 = vpop.trf.xlu0
    %v369 = vpop.trf.xlu0
    %v370 = vpop.trf.xlu0
    %v371 = vpop.trf.xlu0
    %v372 = vpop.trf.xlu0
    %v373 = vpop.trf.xlu0
    %v374 = vpop.trf.xlu0
    %v375 = vpop.trf.xlu0
    %v376 = vpop.trf.xlu0
    %v377 = vpop.trf.xlu0
    %v378 = vpop.trf.xlu0
    %v379 = vpop.trf.xlu0
    %v380 = vpop.trf.xlu0
    %v381 = vpop.trf.xlu0
    %v382 = vpop.trf.xlu0
    %v383 = vpop.trf.xlu0
    %v384 = vld [vmem:[%s2] sm:$0x3]
    %vm385 = vcmp.ne.f32.partialorder %v384, 0.0
    %v386 = vsel %vm385, -1e+12, %v368
    %vm387 = vcmask 58368
    %v388 = vsel %vm387, %v386, -inf
    %389 = vmax.xlane.f32.xlu0 %v388
    %v390 = vpop.xlane.xlu0 %389
    %v391 = vsub.f32 %v386, %v390
    %v392 = vmul.f32 %v391, 1.442695
    %v393 = vpow.pop %v392
    %v394 = vsel %vm387, %v393, 0.0
    %395 = vadd.xlane.f32.xlu0 %v394
    %v396 = vpop.xlane.xlu0 %395
    %v397 = vrcp.pop %v396
    %v398 = vmul.f32 %v393, %v397
    %399 = vst.msk [vmem:[#allocation8] sm:$0x3] %vm387, %v398
    // Predicated region
    $region34: #{tpu_custom_call.1} parent=1 // pred_check
      _
    $region35: #{tpu_custom_call.1} parent=1 // pred_check_branch
      %401 = sbr.rel (0) target = $region37
    $region36: #{tpu_custom_call.1} parent=1 // pred_region
      %s403 = ssub.s32 32, 32
      %404 = vsyncadd [#allocation4], %s403
      %s406 = sshll.u32 [#allocation8], 4
      %s407 = int_to_ptr.vmem [resolvable:$true] %s406
      %409 = dma.vmem_to_hbm [thread:$0]  %s407, 32, %s5, [#allocation4]
    $region37: #{tpu_custom_call.1} parent=1 // pred_fallthru
      _
    // Predicated region
    $region38: #{tpu_custom_call.1} parent=1 // pred_check
      _
    $region39: #{tpu_custom_call.1} parent=1 // pred_check_branch
      %411 = sbr.rel (0) target = $region41
    $region40: #{tpu_custom_call.1} parent=1 // pred_region
      %412 = dma.done [#allocation4], 32
    $region41: #{tpu_custom_call.1} parent=1 // pred_fallthru
      _
    %413 = vsyncpa [#allocation3], 1
    %414 = vsyncpa [#allocation6], 1
    %415 = vsyncpa [#allocation4], 1

</llo_original>
